<compile_context>
chip_gen: v5e
topology: v5e:2x2
jax: 0.10.0
libtpu: 0.0.40
codegen_flags: <defaults>
</compile_context>

<pallas_src>
import functools

import jax
import jax.numpy as jnp
from jax import lax
from jax.experimental import pallas as pl
from jax.experimental.pallas import tpu as pltpu


def _ce_rowloss_kernel(logits_ref, tgt_ref, loss_ref):
    """Per-row NLL loss for one (tm, C) tile of logits."""
    x = logits_ref[...].astype(jnp.float32)                     # (tm, C)
    tgt = tgt_ref[...]                                          # (tm, 1) int32

    # Numerically stable log-softmax pieces; `xm` is shared by the exp-sum and
    # the one-hot gather (one fewer sweep over the tile).
    m = jnp.max(x, axis=-1, keepdims=True)                      # (tm, 1)
    xm = x - m                                                  # (tm, C)
    sumexp = jnp.sum(jnp.exp(xm), axis=-1, keepdims=True)       # (tm, 1)

    col = lax.broadcasted_iota(jnp.int32, xm.shape, 1)
    picked = jnp.sum(jnp.where(col == tgt, xm, 0.0),            # (tm, 1)
                     axis=-1, keepdims=True)

    # loss = logsumexp(x) - x[target] = log(sumexp) - (x[target] - max)
    loss_ref[...] = jnp.log(sumexp) - picked                    # (tm, 1)


def _pick_tile(N, C, in_itemsize):
    """Largest row tile whose VMEM footprint stays inside a conservative budget."""
    # Per-row bytes: double-buffered input tile + one f32 working copy (if the
    # HBM dtype is narrower than f32) + the (tm, 1) int32 target column.
    work_bytes = 0 if in_itemsize >= 4 else 4
    per_row = C * (2 * in_itemsize + work_bytes) + 2 * 4
    budget = 48 * 1024 * 1024                 # safe for v7x (64 MiB VMEM)
    tm = min(512, max(8, budget // per_row))
    tm = max(8, (tm // 8) * 8)                # sublane-aligned
    tm = min(tm, ((N + 7) // 8) * 8)          # don't tile far beyond the batch
    footprint = tm * (C * (2 * in_itemsize + work_bytes) + 2 * 4) + 2 * tm * 4
    return tm, footprint


def cross_entropy(logits, targets, *, reduction="mean", tm=None):
    """logits: (N, C) float; targets: (N,) int. Matches F.nll_loss(F.log_softmax(x, -1), t)."""
    N, C = logits.shape
    in_itemsize = jnp.dtype(logits.dtype).itemsize

    if tm is None:
        tm, footprint = _pick_tile(N, C, in_itemsize)
    else:
        _, footprint = _pick_tile(N, C, in_itemsize)
        footprint = tm * C * (2 * in_itemsize + 4) + 4 * tm

    n_pad = ((N + tm - 1) // tm) * tm
    grid = n_pad // tm

    if n_pad != N:
        logits = jnp.pad(logits, ((0, n_pad - N), (0, 0)))
        targets = jnp.pad(targets, (0, n_pad - N))
    tgt2d = targets.astype(jnp.int32).reshape(n_pad, 1)

    vmem_limit = int(footprint) + (8 << 20)   # tile footprint + slack

    row_losses = pl.pallas_call(
        _ce_rowloss_kernel,
        out_shape=jax.ShapeDtypeStruct((n_pad, 1), jnp.float32),
        grid_spec=pltpu.PrefetchScalarGridSpec(
            num_scalar_prefetch=0,
            grid=(grid,),
            in_specs=[
                pl.BlockSpec((tm, C), lambda i: (i, 0)),
                pl.BlockSpec((tm, 1), lambda i: (i, 0)),
            ],
            out_specs=pl.BlockSpec((tm, 1), lambda i: (i, 0)),
        ),
        compiler_params=pltpu.CompilerParams(
            dimension_semantics=("parallel",),   # independent row tiles -> megacore
            vmem_limit_bytes=vmem_limit,
        ),
    )(logits, tgt2d)

    per_row = row_losses[:N, 0]                  # drop padded rows
    if reduction == "mean":
        return jnp.sum(per_row) / jnp.float32(N)
    if reduction == "sum":
        return jnp.sum(per_row)
    if reduction == "none":
        return per_row
    raise ValueError(f"unsupported reduction: {reduction!r}")


if __name__ == "__main__":
    key = jax.random.PRNGKey(0)
    k1, k2 = jax.random.split(key)

    N, C = 16, 32
    logits = jax.random.normal(k1, (N, C), dtype=jnp.float32)
    targets = jax.random.randint(k2, (N,), 0, C, dtype=jnp.int32)

    loss = cross_entropy(logits, targets, reduction="mean")
    loss = jax.block_until_ready(loss)

    # reference (plain JAX) check
    logp = jax.nn.log_softmax(logits, axis=-1)
    ref = -jnp.mean(jnp.take_along_axis(logp, targets[:, None], axis=-1))
    assert jnp.allclose(loss, ref, atol=1e-5, rtol=1e-5), (loss, ref)

    # also sanity-check a non-multiple-of-tile batch (padding path)
    N2 = 13
    logits2 = jax.random.normal(k1, (N2, C), dtype=jnp.float32)
    targets2 = jax.random.randint(k2, (N2,), 0, C, dtype=jnp.int32)
    loss2 = jax.block_until_ready(cross_entropy(logits2, targets2))
    logp2 = jax.nn.log_softmax(logits2, axis=-1)
    ref2 = -jnp.mean(jnp.take_along_axis(logp2, targets2[:, None], axis=-1))
    assert jnp.allclose(loss2, ref2, atol=1e-5, rtol=1e-5), (loss2, ref2)

    print("KERNEL_OK")
</pallas_src>

<mosaic_0001>
module attributes {stable_mosaic.version = 11 : i64} {
  func.func @_ce_rowloss_kernel(%arg0: i32, %arg1: memref<16x32xf32, #tpu.memory_space<vmem>>, %arg2: memref<16x1xi32, #tpu.memory_space<vmem>>, %arg3: memref<16x1xf32, #tpu.memory_space<vmem>>) attributes {dimension_semantics = [#tpu.dimension_semantics<parallel>], iteration_bounds = array<i64: 1>, scalar_prefetch = 0 : i64, scratch_operands = 0 : i64, tpu.core_type = #tpu.core_type<tc>, window_params = [{transform_indices = @transform_0, window_bounds = array<i64: 16, 32>}, {transform_indices = @transform_1, window_bounds = array<i64: 16, 1>}, {transform_indices = @transform_2, window_bounds = array<i64: 16, 1>}]} {
    %c0 = arith.constant 0 : index
    %c0_0 = arith.constant 0 : index
    %0 = vector.load %arg1[%c0, %c0_0] : memref<16x32xf32, #tpu.memory_space<vmem>>, vector<16x32xf32>
    %c0_1 = arith.constant 0 : index
    %c0_2 = arith.constant 0 : index
    %1 = vector.load %arg2[%c0_1, %c0_2] : memref<16x1xi32, #tpu.memory_space<vmem>>, vector<16x1xi32>
    %cst = arith.constant dense<0xFF800000> : vector<16xf32>
    %2 = vector.multi_reduction <maximumf>, %0, %cst [1] : vector<16x32xf32> to vector<16xf32>
    %3 = vector.shape_cast %2 : vector<16xf32> to vector<16x1xf32>
    %4 = vector.broadcast %3 : vector<16x1xf32> to vector<16x32xf32>
    %5 = arith.subf %0, %4 : vector<16x32xf32>
    %6 = math.exp %5 : vector<16x32xf32>
    %cst_3 = arith.constant dense<0.000000e+00> : vector<16xf32>
    %7 = vector.multi_reduction <add>, %6, %cst_3 [1] : vector<16x32xf32> to vector<16xf32>
    %8 = vector.shape_cast %7 : vector<16xf32> to vector<16x1xf32>
    %9 = tpu.iota {dimensions = array<i32: 1>} : vector<16x32xi32>
    %10 = vector.broadcast %1 : vector<16x1xi32> to vector<16x32xi32>
    %11 = arith.cmpi eq, %9, %10 : vector<16x32xi32>
    %cst_4 = arith.constant 0.000000e+00 : f32
    %12 = vector.broadcast %cst_4 : f32 to vector<16x32xf32>
    %13 = arith.select %11, %5, %12 : vector<16x32xi1>, vector<16x32xf32>
    %cst_5 = arith.constant dense<0.000000e+00> : vector<16xf32>
    %14 = vector.multi_reduction <add>, %13, %cst_5 [1] : vector<16x32xf32> to vector<16xf32>
    %15 = vector.shape_cast %14 : vector<16xf32> to vector<16x1xf32>
    %16 = math.log %8 : vector<16x1xf32>
    %17 = arith.subf %16, %15 : vector<16x1xf32>
    %c0_6 = arith.constant 0 : index
    %c0_7 = arith.constant 0 : index
    %18 = vector.load %arg3[%c0_6, %c0_7] : memref<16x1xf32, #tpu.memory_space<vmem>>, vector<16x1xf32>
    tpu.vector_store %arg3[%c0_6, %c0_7], %17 {strides = array<i32>} : memref<16x1xf32, #tpu.memory_space<vmem>>, vector<16x1xf32>,
    return
  }
  func.func @transform_0(%arg0: i32) -> (i32, i32) {
    %c0_i32 = arith.constant 0 : i32
    %c0_i32_0 = arith.constant 0 : i32
    return %arg0, %c0_i32 : i32, i32
  }
  func.func @transform_1(%arg0: i32) -> (i32, i32) {
    %c0_i32 = arith.constant 0 : i32
    %c0_i32_0 = arith.constant 0 : i32
    return %arg0, %c0_i32 : i32, i32
  }
  func.func @transform_2(%arg0: i32) -> (i32, i32) {
    %c0_i32 = arith.constant 0 : i32
    %c0_i32_0 = arith.constant 0 : i32
    return %arg0, %c0_i32 : i32, i32
  }
}

</mosaic_0001>

<llo_original>
// kernel: tpu_custom_call.1
$region0: #{tpu_custom_call.1}
  #allocation0 [shape = 'u32[]', space=smem, size = 0x4, offset = 0x4, fixed_abs, tag = 'smem constant byte address 0x4 - core index']
  #allocation1 [shape = 'u32[72,128]{1,0:T(1,128)}', space=vmem, size = 0x9000, scoped, tag = 'internal scratch']
  %s0 = inlined_call_operand.vmem [shape: f32[16,32], index: 0, kind: input, shape index: {}]
  %s1 = inlined_call_operand.vmem [shape: s32[16,1], index: 1, kind: input, shape index: {}]
  %s2 = inlined_call_operand.vmem [shape: f32[16,1], index: 2, kind: output, shape index: {}]
  %s3 = sld [smem:[#allocation0]]
  $region18: #{tpu_custom_call.1} parent=0
    _
  %s5 = ssub.s32 1, %s3
  %s6 = scalar_select 0, %s5, %s3
  // Predicated region
  $region2: #{tpu_custom_call.1} parent=0 // pred_check
    _
  $region3: #{tpu_custom_call.1} parent=0 // pred_check_branch
    %8 = sbr.rel (0) target = $region5
  $region4: #{tpu_custom_call.1} parent=0 // pred_region
    _
  $region5: #{tpu_custom_call.1} parent=0 // pred_fallthru
    _
  // Predicated region
  $region6: #{tpu_custom_call.1} parent=0 // pred_check
    _
  $region7: #{tpu_custom_call.1} parent=0 // pred_check_branch
    %10 = sbr.rel (0) target = $region9
  $region8: #{tpu_custom_call.1} parent=0 // pred_region
    _
  $region9: #{tpu_custom_call.1} parent=0 // pred_fallthru
    _
  %v11 = vld [vmem:[%s0] sm:$0xff]
  %v12 = vld [vmem:[%s0 + $0x8] sm:$0xff]
  %v13 = vld [vmem:[%s1] sm:$0xff]
  %v14 = vld [vmem:[%s1 + $0x8] sm:$0xff]
  %vm15 = vcmask 261120
  %v16 = vsel %vm15, %v11, -inf
  %17 = vmax.xlane.f32.xlu0 %v16
  %v18 = vpop.xlane.xlu0 %17
  %v19 = vsel %vm15, %v12, -inf
  %20 = vmax.xlane.f32.xlu0 %v19
  %v21 = vpop.xlane.xlu0 %20
  %v22 = vsub.f32 %v11, %v18
  %v23 = vsub.f32 %v12, %v21
  %v24 = vmul.f32 %v22, 1.442695
  %v25 = vpow.pop %v24
  %v26 = vmul.f32 %v23, 1.442695
  %v27 = vpow.pop %v26
  %v28 = vsel %vm15, %v25, 0.0
  %29 = vadd.xlane.f32.xlu0 %v28
  %v30 = vpop.xlane.xlu0 %29
  %v31 = vsel %vm15, %v27, 0.0
  %32 = vadd.xlane.f32.xlu0 %v31
  %v33 = vpop.xlane.xlu0 %32
  %v34 = vlaneseq
  %v35 = vand.u32 %v34, 127
  %36 = vset.pattern.permute.xlu0 0
  %37 = vperm.xlu0 %36, %v13
  %v38 = vpop.permute.xlu0 %37
  %39 = vset.pattern.permute.xlu0 0
  %40 = vperm.xlu0 %39, %v14
  %v41 = vpop.permute.xlu0 %40
  %vm42 = vcmp.eq.s32.totalorder %v35, %v38
  %vm43 = vcmp.eq.s32.totalorder %v35, %v41
  %v44 = vsel %vm42, %v22, 0.0
  %v45 = vsel %vm43, %v23, 0.0
  %v46 = vsel %vm15, %v44, 0.0
  %47 = vadd.xlane.f32.xlu0 %v46
  %v48 = vpop.xlane.xlu0 %47
  %v49 = vsel %vm15, %v45, 0.0
  %50 = vadd.xlane.f32.xlu0 %v49
  %v51 = vpop.xlane.xlu0 %50
  %v52 = vlog2.pop %v30
  %v53 = vmul.f32 %v52, 0.6931472
  %v54 = vlog2.pop %v33
  %v55 = vmul.f32 %v54, 0.6931472
  %v56 = vsub.f32 %v53, %v48
  %v57 = vsub.f32 %v55, %v51
  %vm58 = vcmask 7168
  %59 = vst.msk [vmem:[%s2] sm:$0xff] %vm58, %v56
  %60 = vst.msk [vmem:[%s2 + $0x8] sm:$0xff] %vm58, %v57
  // Predicated region
  $region10: #{tpu_custom_call.1} parent=0 // pred_check
    _
  $region11: #{tpu_custom_call.1} parent=0 // pred_check_branch
    %62 = sbr.rel (0) target = $region13
  $region12: #{tpu_custom_call.1} parent=0 // pred_region
    _
  $region13: #{tpu_custom_call.1} parent=0 // pred_fallthru
    _
  // Predicated region
  $region14: #{tpu_custom_call.1} parent=0 // pred_check
    _
  $region15: #{tpu_custom_call.1} parent=0 // pred_check_branch
    %64 = sbr.rel (0) target = $region17
  $region16: #{tpu_custom_call.1} parent=0 // pred_region
    _
  $region17: #{tpu_custom_call.1} parent=0 // pred_fallthru
    _

</llo_original>
